<compile_context>
chip_gen: v7x
topology: tpu7x:2x2x1
jax: 0.10.0
libtpu: 0.0.40
codegen_flags: <defaults>
</compile_context>

<pallas_src>
import jax
import jax.numpy as jnp
from jax.experimental import pallas as pl
from jax.experimental.pallas import tpu as pltpu

INPUT_SIZE = 1
OUTPUT_SIZE = 1

LANE = 128             # lane width: last dim of the slab
SUBLANE = 8            # sublane alignment for the second-to-last dim
MAX_BLOCK_ROWS = 4096  # 4096x128 f32 = 2 MiB/block; ~8 MiB double-buffered in+out,
                       # safely under the 16 MiB v5e scoped-VMEM default.


def scalar_linear_kernel(x_ref, w_ref, b_ref, o_ref):
    # x_ref: (block_rows, 128) VMEM tile in the input's native dtype.
    # w_ref/b_ref: (1,) f32 scalars in SMEM.
    # Pure VPU: in-kernel upcast + broadcast scalar multiply-add; no MXU, no XLU.
    w = w_ref[0]
    b = b_ref[0]
    x = x_ref[...].astype(jnp.float32)
    o_ref[...] = (x * w + b).astype(o_ref.dtype)


def _pick_block_rows(rows):
    """rows is a multiple of SUBLANE.  Big blocks to amortize the ~0.35us per-step
    overhead, but aim for >=2 grid steps when there is enough work so both v7x
    TensorCores get a share (neutral on v5e/v6e)."""
    if rows <= 2 * SUBLANE:
        return rows
    half = (rows // 2 // SUBLANE) * SUBLANE
    return max(SUBLANE, min(MAX_BLOCK_ROWS, half))


@jax.jit
def _linear_forward_impl(x, w, b):
    n, in_f = x.shape
    out_f = w.shape[0]
    assert in_f == INPUT_SIZE and out_f == OUTPUT_SIZE, "kernel specialized to Linear(1,1)"
    dtype = x.dtype

    # --- Lane-dense slab layout, native dtype --------------------------------------
    # Flatten (N,1) -> (N,), pad only up to one (8*128) tile (not a block multiple:
    # block shape must be (8,128)-aligned, the array need not divide by the block).
    xv = x.reshape(-1)
    n_pad = pl.cdiv(n, SUBLANE * LANE) * (SUBLANE * LANE)
    if n_pad != n:
        xv = jnp.pad(xv, (0, n_pad - n))
    rows = n_pad // LANE
    x_slab = xv.reshape(rows, LANE)

    block_rows = _pick_block_rows(rows)
    grid = (pl.cdiv(rows, block_rows),)   # partial boundary block is fine (elementwise)

    # Scalar params live in SMEM (no padded (8,128) VMEM tiles, no extra DMAs).
    w1 = w.reshape(1).astype(jnp.float32)
    b1 = b.reshape(1).astype(jnp.float32)

    out_slab = pl.pallas_call(
        scalar_linear_kernel,
        out_shape=jax.ShapeDtypeStruct((rows, LANE), dtype),
        grid_spec=pltpu.PrefetchScalarGridSpec(
            num_scalar_prefetch=0,
            grid=grid,
            in_specs=[
                pl.BlockSpec((block_rows, LANE), lambda i: (i, 0)),
                pl.BlockSpec(memory_space=pltpu.MemorySpace.SMEM),
                pl.BlockSpec(memory_space=pltpu.MemorySpace.SMEM),
            ],
            out_specs=pl.BlockSpec((block_rows, LANE), lambda i: (i, 0)),
        ),
        compiler_params=pltpu.CompilerParams(
            # Row blocks are independent -> shard across both TCs on v7x; neutral on v5e/v6e.
            dimension_semantics=("parallel",),
        ),
    )(x_slab, w1, b1)

    return out_slab.reshape(-1)[:n].reshape(n, out_f)


def linear_forward(x, w, b):
    """out = x @ w.T + b with nn.Linear(1, 1) semantics (x: (N,1), w: (1,1), b: (1,))."""
    return _linear_forward_impl(x, w, b)


if __name__ == "__main__":
    key = jax.random.PRNGKey(0)
    kx, kw, kb, kx2 = jax.random.split(key, 4)

    # Deterministic "trained" parameters (shapes from nn.Linear(1, 1)).
    w = jax.random.normal(kw, (OUTPUT_SIZE, INPUT_SIZE), dtype=jnp.float32)
    b = jax.random.normal(kb, (OUTPUT_SIZE,), dtype=jnp.float32)

    # Small batch of scalar inputs: (N, input_size) = (8, 1)
    x = jax.random.normal(kx, (8, INPUT_SIZE), dtype=jnp.float32)
    out = jax.block_until_ready(linear_forward(x, w, b))
    ref = x @ w.T + b
    assert out.shape == (8, OUTPUT_SIZE)
    assert out.dtype == x.dtype
    assert jnp.allclose(out, ref, atol=1e-5, rtol=1e-5)

    # Non-aligned batch: exercises padding to one (8,128) tile + slicing back.
    x2 = jax.random.normal(kx2, (300, INPUT_SIZE), dtype=jnp.float32)
    out2 = jax.block_until_ready(linear_forward(x2, w, b))
    ref2 = x2 @ w.T + b
    assert out2.shape == (300, OUTPUT_SIZE)
    assert jnp.allclose(out2, ref2, atol=1e-5, rtol=1e-5)

    # Native bf16 input path: no wrapper-side upcast, cast happens in-kernel.
    x3 = x2.astype(jnp.bfloat16)
    out3 = jax.block_until_ready(linear_forward(x3, w, b))
    ref3 = x3.astype(jnp.float32) @ w.T + b
    assert out3.shape == (300, OUTPUT_SIZE)
    assert out3.dtype == jnp.bfloat16
    assert jnp.allclose(out3.astype(jnp.float32), ref3, atol=5e-2, rtol=5e-2)

    print("KERNEL_OK")
</pallas_src>

<mosaic_0001>
module attributes {stable_mosaic.version = 11 : i64} {
  func.func @scalar_linear_kernel(%arg0: i32, %arg1: memref<8x128xf32, #tpu.memory_space<vmem>>, %arg2: memref<1xf32, #tpu.memory_space<smem>>, %arg3: memref<1xf32, #tpu.memory_space<smem>>, %arg4: memref<8x128xf32, #tpu.memory_space<vmem>>) attributes {dimension_semantics = [#tpu.dimension_semantics<parallel>], iteration_bounds = array<i64: 1>, scalar_prefetch = 0 : i64, scratch_operands = 0 : i64, tpu.core_type = #tpu.core_type<tc>, window_params = [{transform_indices = @transform_0, window_bounds = array<i64: 8, 128>}, {transform_indices = @transform_1, window_bounds = array<i64: 1>}, {transform_indices = @transform_2, window_bounds = array<i64: 1>}, {transform_indices = @transform_3, window_bounds = array<i64: 8, 128>}]} {
    %c0 = arith.constant 0 : index
    %0 = memref.load %arg2[%c0] : memref<1xf32, #tpu.memory_space<smem>>
    %c0_0 = arith.constant 0 : index
    %1 = memref.load %arg3[%c0_0] : memref<1xf32, #tpu.memory_space<smem>>
    %c0_1 = arith.constant 0 : index
    %c0_2 = arith.constant 0 : index
    %2 = vector.load %arg1[%c0_1, %c0_2] : memref<8x128xf32, #tpu.memory_space<vmem>>, vector<8x128xf32>
    %3 = vector.broadcast %0 : f32 to vector<8x128xf32>
    %4 = arith.mulf %2, %3 : vector<8x128xf32>
    %5 = vector.broadcast %1 : f32 to vector<8x128xf32>
    %6 = arith.addf %4, %5 : vector<8x128xf32>
    %c0_3 = arith.constant 0 : index
    %c0_4 = arith.constant 0 : index
    %7 = vector.load %arg4[%c0_3, %c0_4] : memref<8x128xf32, #tpu.memory_space<vmem>>, vector<8x128xf32>
    tpu.vector_store %arg4[%c0_3, %c0_4], %6 {strides = array<i32>} : memref<8x128xf32, #tpu.memory_space<vmem>>, vector<8x128xf32>,
    return
  }
  func.func @transform_0(%arg0: i32) -> (i32, i32) {
    %c0_i32 = arith.constant 0 : i32
    %c0_i32_0 = arith.constant 0 : i32
    return %arg0, %c0_i32 : i32, i32
  }
  func.func @transform_1(%arg0: i32) -> i32 {
    %c0_i32 = arith.constant 0 : i32
    %c0_i32_0 = arith.constant 0 : i32
    return %c0_i32 : i32
  }
  func.func @transform_2(%arg0: i32) -> i32 {
    %c0_i32 = arith.constant 0 : i32
    %c0_i32_0 = arith.constant 0 : i32
    return %c0_i32 : i32
  }
  func.func @transform_3(%arg0: i32) -> (i32, i32) {
    %c0_i32 = arith.constant 0 : i32
    %c0_i32_0 = arith.constant 0 : i32
    return %arg0, %c0_i32 : i32, i32
  }
}

</mosaic_0001>

<llo_original>
// kernel: _linear_forward_impl.1
$region0: #{_linear_forward_impl.1}
  #allocation0 [shape = 'u32[]', space=smem, size = 0x4, offset = 0x4, fixed_abs, tag = 'smem constant byte address 0x4 - core index']
  #allocation1 [shape = 'u32[144,128]{1,0:T(1,128)}', space=vmem, size = 0x12000, scoped, tag = 'internal scratch']
  #allocation2 [shape = 'f32[1]{0:T(128)S(6)}', space=smem, size = 0x200, scoped, tag = 'scoped memory for _linear_forward_impl.1']
  #allocation3 [shape = 'f32[1]{0:T(128)S(6)}', space=smem, size = 0x200, scoped, tag = 'scoped memory for _linear_forward_impl.1']
  %s0 = inlined_call_operand.vmem [shape: f32[8,128], index: 0, kind: input, shape index: {}]
  %s1 = inlined_call_operand.<no memory space> [shape: f32[1], index: 1, kind: input, shape index: {}]
  %s2 = inlined_call_operand.<no memory space> [shape: f32[1], index: 2, kind: input, shape index: {}]
  %s3 = inlined_call_operand.vmem [shape: f32[8,128], index: 3, kind: output, shape index: {}]
  %s4 = sld [smem:[#allocation0]]
  $region22: #{_linear_forward_impl.1} parent=0
    _
  %s6 = ssub.s32 1, %s4
  %s7 = scalar_select 0, %s6, %s4
  %8 = sst [smem:[#allocation2]] %s1
  %9 = sst [smem:[#allocation3]] %s2
  // Predicated region
  $region2: #{_linear_forward_impl.1} parent=0 // pred_check
    _
  $region3: #{_linear_forward_impl.1} parent=0 // pred_check_branch
    %11 = sbr.rel (0) target = $region5
  $region4: #{_linear_forward_impl.1} parent=0 // pred_region
    _
  $region5: #{_linear_forward_impl.1} parent=0 // pred_fallthru
    _
  // Predicated region
  $region6: #{_linear_forward_impl.1} parent=0 // pred_check
    _
  $region7: #{_linear_forward_impl.1} parent=0 // pred_check_branch
    %13 = sbr.rel (0) target = $region9
  $region8: #{_linear_forward_impl.1} parent=0 // pred_region
    _
  $region9: #{_linear_forward_impl.1} parent=0 // pred_fallthru
    _
  // Predicated region
  $region10: #{_linear_forward_impl.1} parent=0 // pred_check
    _
  $region11: #{_linear_forward_impl.1} parent=0 // pred_check_branch
    %15 = sbr.rel (0) target = $region13
  $region12: #{_linear_forward_impl.1} parent=0 // pred_region
    _
  $region13: #{_linear_forward_impl.1} parent=0 // pred_fallthru
    _
  %s16 = sld [smem:[#allocation2]]
  %s17 = sld [smem:[#allocation3]]
  %v18 = vld [vmem:[%s0] sm:$0xff]
  %v19 = vstv %s16
  %v20 = vmul.f32 %v18, %v19
  %v21 = vstv %s17
  %v22 = vadd.f32 %v20, %v21
  %23 = vst [vmem:[%s3] sm:$0xff] %v22
  // Predicated region
  $region14: #{_linear_forward_impl.1} parent=0 // pred_check
    _
  $region15: #{_linear_forward_impl.1} parent=0 // pred_check_branch
    %25 = sbr.rel (0) target = $region17
  $region16: #{_linear_forward_impl.1} parent=0 // pred_region
    _
  $region17: #{_linear_forward_impl.1} parent=0 // pred_fallthru
    _
  // Predicated region
  $region18: #{_linear_forward_impl.1} parent=0 // pred_check
    _
  $region19: #{_linear_forward_impl.1} parent=0 // pred_check_branch
    %27 = sbr.rel (0) target = $region21
  $region20: #{_linear_forward_impl.1} parent=0 // pred_region
    _
  $region21: #{_linear_forward_impl.1} parent=0 // pred_fallthru
    _

</llo_original>
